<compile_context>
chip_gen: v7x
topology: tpu7x:2x2x1
jax: 0.10.0
libtpu: 0.0.40
codegen_flags: <defaults>
</compile_context>

<pallas_src>
import math

import jax
import jax.numpy as jnp
from jax.experimental import pallas as pl
from jax.experimental.pallas import tpu as pltpu


# ----------------------------- kernel bodies ------------------------------ #

def _silu_kernel(x_ref, o_ref):
    # x_ref/o_ref: (TR, D) tiles in VMEM.
    x = x_ref[...].astype(jnp.float32)
    o_ref[...] = (x * jax.nn.sigmoid(x)).astype(o_ref.dtype)


def _swiglu_fused_kernel(x_ref, o_ref):
    # Full-width (TR, D) input tile; slice the two halves in-register.  When
    # D//2 is a multiple of 128 the slice sits on a lane-tile boundary and is
    # a free vreg selection (no relayout).
    x = x_ref[...].astype(jnp.float32)
    half = x.shape[-1] // 2
    x1 = x[:, :half]
    x2 = x[:, half:]
    o_ref[...] = (x1 * (x2 * jax.nn.sigmoid(x2))).astype(o_ref.dtype)


def _swiglu_split_kernel(x1_ref, x2_ref, o_ref):
    # x1_ref/x2_ref: two lane-aligned (TR, D//2) views of the same HBM array,
    # delivered by two independent BlockSpecs (feature blocks 0 and 1).
    x1 = x1_ref[...].astype(jnp.float32)
    x2 = x2_ref[...].astype(jnp.float32)
    o_ref[...] = (x1 * (x2 * jax.nn.sigmoid(x2))).astype(o_ref.dtype)


# ------------------------------ tiling helpers ----------------------------- #

_TARGET_TILE_BYTES = 4 * 1024 * 1024  # ~4 MiB of full-width input per grid step


def _sublane_multiple(itemsize: int) -> int:
    # Sub-32-bit dtypes pack multiple rows per sublane group; keep tiles
    # fully packed so stores are unmasked vst's.
    return {1: 32, 2: 16}.get(itemsize, 8)


def _pick_row_tile(rows: int, width: int, itemsize: int) -> int:
    """Row tile: ~4 MiB of full-width input, dtype-aware sublane rounding,
    and >= 2 grid blocks whenever rows allow (so both v7x TCs stream)."""
    sub = _sublane_multiple(itemsize)
    tr = (_TARGET_TILE_BYTES // max(1, width * itemsize)) // sub * sub
    tr = max(sub, tr)
    if tr >= rows:
        if rows > sub:
            # Split into at least two blocks instead of one giant block.
            tr = max(sub, ((rows + 1) // 2) // sub * sub)
        else:
            tr = rows
    return min(tr, rows)


def _compiler_params(per_step_tile_bytes: int) -> pltpu.CompilerParams:
    """Explicit VMEM limit: double-buffered in/out tiles + headroom, capped
    well under v7x's 64 MiB physical VMEM and above v5e's 16 MiB default."""
    need = 2 * per_step_tile_bytes          # 2-deep buffering of every tile
    limit = int(min(48 * 1024 * 1024, max(2 * need, 16 * 1024 * 1024)))
    return pltpu.CompilerParams(
        dimension_semantics=("parallel",),
        vmem_limit_bytes=limit,
    )


# --------------------------------- wrapper --------------------------------- #

def swiglu1(x: jax.Array, *, row_tile: int | None = None) -> jax.Array:
    """Pallas implementation of SwiGLU1.forward."""
    orig_shape = x.shape
    d = orig_shape[-1]
    rows = int(math.prod(orig_shape[:-1])) if len(orig_shape) > 1 else 1
    x2d = x.reshape(rows, d)
    itemsize = jnp.dtype(x.dtype).itemsize

    if orig_shape[0] == 1:
        # output = silu(x), same shape as x.
        tr = row_tile if row_tile is not None else _pick_row_tile(rows, d, itemsize)
        tr = min(tr, rows)
        n_blocks = pl.cdiv(rows, tr)
        tile_bytes = tr * d * itemsize * 2  # input tile + output tile per step
        out2d = pl.pallas_call(
            _silu_kernel,
            out_shape=jax.ShapeDtypeStruct((rows, d), x.dtype),
            grid=(n_blocks,),
            in_specs=[pl.BlockSpec((tr, d), lambda i: (i, 0))],
            out_specs=pl.BlockSpec((tr, d), lambda i: (i, 0)),
            compiler_params=_compiler_params(tile_bytes),
        )(x2d)
        output = out2d.reshape(orig_shape)
    else:
        # output = x1 * silu(x2), last dim halved.
        assert d % 2 == 0, "gated SwiGLU branch requires an even last dimension"
        half = d // 2
        tr = row_tile if row_tile is not None else _pick_row_tile(rows, d, itemsize)
        tr = min(tr, rows)
        n_blocks = pl.cdiv(rows, tr)

        # Two strided half-streams only pay off when each per-row segment is
        # long; for narrow halves one contiguous full-width DMA wins and the
        # 128-aligned in-register slice is free.
        use_split = (half % 128 == 0) and (half * itemsize >= 2048)

        if use_split:
            tile_bytes = tr * half * itemsize * 3  # x1 + x2 + out per step
            out2d = pl.pallas_call(
                _swiglu_split_kernel,
                out_shape=jax.ShapeDtypeStruct((rows, half), x.dtype),
                grid=(n_blocks,),
                in_specs=[
                    pl.BlockSpec((tr, half), lambda i: (i, 0)),  # x1 half
                    pl.BlockSpec((tr, half), lambda i: (i, 1)),  # x2 half
                ],
                out_specs=pl.BlockSpec((tr, half), lambda i: (i, 0)),
                compiler_params=_compiler_params(tile_bytes),
            )(x2d, x2d)
        else:
            # TODO(synk): when half % 128 != 0 the in-register slice crosses a
            # lane-tile boundary (per-tile relayout); pad the feature dim to
            # 128 or use pltpu.roll if that case ever becomes hot.
            tile_bytes = tr * (d + half) * itemsize  # full-width in + half out
            out2d = pl.pallas_call(
                _swiglu_fused_kernel,
                out_shape=jax.ShapeDtypeStruct((rows, half), x.dtype),
                grid=(n_blocks,),
                in_specs=[pl.BlockSpec((tr, d), lambda i: (i, 0))],
                out_specs=pl.BlockSpec((tr, half), lambda i: (i, 0)),
                compiler_params=_compiler_params(tile_bytes),
            )(x2d)
        output = out2d.reshape(orig_shape[:-1] + (half,))

    # Mirror PyTorch's `output.view(x.shape[1:])` on shape mismatch (only
    # well-defined when batch == 2, exactly like the original module).
    if output.shape != orig_shape:
        output = output.reshape(orig_shape[1:])
    return output


# -------------------------------- reference -------------------------------- #

def _reference(x: jax.Array) -> jax.Array:
    """Pure-JAX reference matching the PyTorch module."""
    half = x.shape[-1] // 2
    x1, x2 = x[..., :half], x[..., half:]
    if x.shape[0] == 1:
        out = x * jax.nn.sigmoid(x)
    else:
        out = x1 * (x2 * jax.nn.sigmoid(x2))
    if out.shape != x.shape:
        out = out.reshape(x.shape[1:])
    return out


if __name__ == "__main__":
    key = jax.random.PRNGKey(0)
    k1, k2, k3, k4 = jax.random.split(key, 4)

    # Case 1: batch=2, half=128 (narrow) -> gated branch, fused full-width
    #         kernel, then view(x.shape[1:]) reshape.
    x_a = jax.random.normal(k1, (2, 8, 256), dtype=jnp.float32)
    out_a = jax.block_until_ready(swiglu1(x_a))
    ref_a = _reference(x_a)
    assert out_a.shape == (8, 256), out_a.shape
    assert jnp.allclose(out_a, ref_a, atol=1e-6, rtol=1e-6)

    # Case 2: batch=1 -> plain silu branch, output shape unchanged.
    x_b = jax.random.normal(k2, (1, 8, 256), dtype=jnp.float32)
    out_b = jax.block_until_ready(swiglu1(x_b))
    ref_b = _reference(x_b)
    assert out_b.shape == (1, 8, 256), out_b.shape
    assert jnp.allclose(out_b, ref_b, atol=1e-6, rtol=1e-6)

    # Case 3: bf16 input -> dtype-aware sublane rounding (tile multiple of 16)
    #         and a >= 2-block pipelined grid.
    x_c = jax.random.normal(k3, (2, 16, 256), dtype=jnp.bfloat16)
    out_c = jax.block_until_ready(swiglu1(x_c))
    ref_c = _reference(x_c.astype(jnp.float32)).astype(jnp.bfloat16)
    assert out_c.shape == (16, 256), out_c.shape
    assert jnp.allclose(out_c.astype(jnp.float32), ref_c.astype(jnp.float32),
                        atol=2e-2, rtol=2e-2)

    # Case 4: batch=2, wide half (512 f32 = 2 KiB/row) -> two-BlockSpec split
    #         path with lane-aligned half-tensor views.
    x_d = jax.random.normal(k4, (2, 8, 1024), dtype=jnp.float32)
    out_d = jax.block_until_ready(swiglu1(x_d))
    ref_d = _reference(x_d)
    assert out_d.shape == (8, 1024), out_d.shape
    assert jnp.allclose(out_d, ref_d, atol=1e-6, rtol=1e-6)

    print("KERNEL_OK")
</pallas_src>

<mosaic_0001>
module attributes {stable_mosaic.version = 11 : i64} {
  func.func @_swiglu_fused_kernel(%arg0: i32, %arg1: memref<8x256xf32, #tpu.memory_space<vmem>>, %arg2: memref<8x128xf32, #tpu.memory_space<vmem>>) attributes {dimension_semantics = [#tpu.dimension_semantics<parallel>], iteration_bounds = array<i64: 2>, scalar_prefetch = 0 : i64, scratch_operands = 0 : i64, tpu.core_type = #tpu.core_type<tc>, window_params = [{transform_indices = @transform_0, window_bounds = array<i64: 8, 256>}, {transform_indices = @transform_1, window_bounds = array<i64: 8, 128>}]} {
    %c0 = arith.constant 0 : index
    %c0_0 = arith.constant 0 : index
    %0 = vector.load %arg1[%c0, %c0_0] : memref<8x256xf32, #tpu.memory_space<vmem>>, vector<8x256xf32>
    %1 = vector.extract_strided_slice %0 {offsets = [0, 0], sizes = [8, 128], strides = [1, 1]} : vector<8x256xf32> to vector<8x128xf32>
    %2 = vector.extract_strided_slice %0 {offsets = [0, 128], sizes = [8, 128], strides = [1, 1]} : vector<8x256xf32> to vector<8x128xf32>
    %3 = arith.negf %2 : vector<8x128xf32>
    %4 = math.exp %3 : vector<8x128xf32>
    %cst = arith.constant 1.000000e+00 : f32
    %5 = vector.broadcast %cst : f32 to vector<8x128xf32>
    %6 = arith.addf %5, %4 : vector<8x128xf32>
    %7 = arith.divf %5, %6 : vector<8x128xf32>
    %8 = arith.mulf %2, %7 : vector<8x128xf32>
    %9 = arith.mulf %1, %8 : vector<8x128xf32>
    %c0_1 = arith.constant 0 : index
    %c0_2 = arith.constant 0 : index
    %10 = vector.load %arg2[%c0_1, %c0_2] : memref<8x128xf32, #tpu.memory_space<vmem>>, vector<8x128xf32>
    tpu.vector_store %arg2[%c0_1, %c0_2], %9 {strides = array<i32>} : memref<8x128xf32, #tpu.memory_space<vmem>>, vector<8x128xf32>,
    return
  }
  func.func @transform_0(%arg0: i32) -> (i32, i32) {
    %c0_i32 = arith.constant 0 : i32
    %c0_i32_0 = arith.constant 0 : i32
    return %arg0, %c0_i32 : i32, i32
  }
  func.func @transform_1(%arg0: i32) -> (i32, i32) {
    %c0_i32 = arith.constant 0 : i32
    %c0_i32_0 = arith.constant 0 : i32
    return %arg0, %c0_i32 : i32, i32
  }
}

</mosaic_0001>

<llo_original>
// kernel: tpu_custom_call.1
$region0: #{tpu_custom_call.1}
  #allocation0 [shape = 'u32[]', space=smem, size = 0x4, offset = 0x4, fixed_abs, tag = 'smem constant byte address 0x4 - core index']
  #allocation1 [shape = 'u32[144,128]{1,0:T(1,128)}', space=vmem, size = 0x12000, scoped, tag = 'internal scratch']
  %s0 = inlined_call_operand.hbm [shape: f32[16,256], index: 0, kind: input, shape index: {}]
  %s1 = inlined_call_operand.hbm [shape: f32[16,128], index: 1, kind: output, shape index: {}]
  %s2 = sld [smem:[#allocation0]]
  $region41: #{tpu_custom_call.1} parent=0
    _
  %s4 = ssub.s32 1, %s2
  %s5 = scalar_select 0, %s4, %s2
  $region1: #{tpu_custom_call.1} parent=0
    #allocation2 [shape = 'u8[16384]{0}', space=vmem, size = 0x4000, scoped, tag = 'input window, operand 0']
    #allocation3 [shape = 's32[2]{0}', space=sflag, size = 0x8, scoped, tag = 'scoped memory for tpu_custom_call.1']
    #allocation4 [shape = 's32[2]{0}', space=sflag, size = 0x8, scoped, tag = 'scoped memory for tpu_custom_call.1']
    #allocation5 [shape = 'u8[8192]{0}', space=vmem, size = 0x2000, scoped, tag = 'output window, operand 0']
    %6 = vsyncpa [#allocation3], 0
    %s7 = scalar_lea.sflag [#allocation3], 1
    %8 = vsyncpa %s7, 0
    %9 = vsyncpa [#allocation4], 0
    %s10 = scalar_lea.sflag [#allocation4], 1
    %11 = vsyncpa %s10, 0
    loop: start=0, step=1, limit=4
    $region2: #{tpu_custom_call.1} parent=1 // loop_pre_header
      _
    $region3: #{tpu_custom_call.1} parent=1 // loop_header
      %s13 = sphi 0, %s17
      %p14 = scmp.ge.s32.totalorder %s13, 4
      %s23 = sphi 0, %s25
      %s26 = sphi 0, %s23
      %s27 = sphi 0, %s26
      %s43 = sphi 0, %s27
      %s49 = sphi 0, %s51
      %s52 = sphi 0, %s49
      %s53 = sphi 0, %s52
      %s69 = sphi 0, %s53
    $region4: #{tpu_custom_call.1} parent=1 // loop_header_branch
      %16 = sbr.rel (%p14) target = $region8
    $region5: #{tpu_custom_call.1} parent=1 // loop_body
      %s18 = ssub.s32 %s13, 1
      %s19 = ssub.s32 %s13, 2
      %s20 = sadd.s32 %s13, 1
      %s21 = ssub.s32 %s13, %s20
      %p22 = scmp.eq.s32.totalorder %s21, 0
      %s24 = sadd.s32 %s23, 1
      %s25 = scalar_select %p22, %s23, %s24
      %p28 = pneg %p22
      %p29 = scmp.eq.s32.totalorder %s13, 1
      %p30 = por %p28, %p29
      %p31 = scmp.ne.s32.totalorder %s23, %s26
      %p32 = scmp.eq.s32.totalorder %s13, 0
      %p33 = por %p31, %p32
      %p34 = scmp.ne.s32.totalorder %s23, %s26
      %p35 = scmp.eq.s32.totalorder %s18, 1
      %p36 = por %p34, %p35
      %p37 = scmp.ne.s32.totalorder %s26, %s27
      %p38 = scmp.eq.s32.totalorder %s18, 0
      %p39 = por %p37, %p38
      %p40 = scmp.ne.s32.totalorder %s26, %s27
      %p41 = scmp.eq.s32.totalorder %s19, 1
      %p42 = por %p40, %p41
      %p44 = scmp.ne.s32.totalorder %s27, %s43
      %p45 = scmp.eq.s32.totalorder %s19, 0
      %p46 = por %p44, %p45
      %s47 = ssub.s32 %s13, %s20
      %p48 = scmp.eq.s32.totalorder %s47, 0
      %s50 = sadd.s32 %s49, 1
      %s51 = scalar_select %p48, %s49, %s50
      %p54 = pneg %p48
      %p55 = scmp.eq.s32.totalorder %s13, 1
      %p56 = por %p54, %p55
      %p57 = scmp.ne.s32.totalorder %s49, %s52
      %p58 = scmp.eq.s32.totalorder %s13, 0
      %p59 = por %p57, %p58
      %p60 = scmp.ne.s32.totalorder %s49, %s52
      %p61 = scmp.eq.s32.totalorder %s18, 1
      %p62 = por %p60, %p61
      %p63 = scmp.ne.s32.totalorder %s52, %s53
      %p64 = scmp.eq.s32.totalorder %s18, 0
      %p65 = por %p63, %p64
      %p66 = scmp.ne.s32.totalorder %s52, %s53
      %p67 = scmp.eq.s32.totalorder %s19, 1
      %p68 = por %p66, %p67
      %p70 = scmp.ne.s32.totalorder %s53, %s69
      %p71 = scmp.eq.s32.totalorder %s19, 0
      %p72 = por %p70, %p71
      %p73 = scmp.le.s32.totalorder 1, %s13
      %p74 = scmp.lt.s32.totalorder %s13, 3
      %p75 = pnand %p73, %p74
      %p76 = pneg %p75
      // Predicated region
      $region9: #{tpu_custom_call.1} parent=5 // pred_check
        _
      $region10: #{tpu_custom_call.1} parent=5 // pred_check_branch
        %78 = sbr.rel (%p75) target = $region12
      $region11: #{tpu_custom_call.1} parent=5 // pred_region
        %s79 = ssub.s32 %s13, 1
      $region12: #{tpu_custom_call.1} parent=5 // pred_fallthru
        _
      %p80 = scmp.lt.s32.totalorder %s13, 2
      // Predicated region
      $region13: #{tpu_custom_call.1} parent=5 // pred_check
        %p81 = pneg %p80
      $region14: #{tpu_custom_call.1} parent=5 // pred_check_branch
        %83 = sbr.rel (%p81) target = $region16
      $region15: #{tpu_custom_call.1} parent=5 // pred_region
        // Predicated region
        $region17: #{tpu_custom_call.1} parent=15 // pred_check
          %p84 = pneg %p33
        $region18: #{tpu_custom_call.1} parent=15 // pred_check_branch
          %86 = sbr.rel (%p84) target = $region20
        $region19: #{tpu_custom_call.1} parent=15 // pred_region
          %s87 = sand.u32 %s23, 1
          %s88 = scalar_lea.sflag [#allocation3], %s87
          %s89 = sand.u32 %s23, 1
          %s90 = smul.addr %s89, 16
          %s91 = scalar_lea.vmem [#allocation2], %s90
          %s93 = ssub.s32 256, 256
          %94 = vsyncadd %s88, %s93
          %s95 = smul.addr %s13, 2
          %s96 = smul.addr %s95, 128
          %s97 = scalar_lea.hbm %s0, %s96
          %s99 = sshll.u32 %s91, 4
          %s100 = int_to_ptr.vmem [resolvable:$true] %s99
          %102 = dma.hbm_to_vmem [thread:$0]  %s97, 256, %s100, %s88
        $region20: #{tpu_custom_call.1} parent=15 // pred_fallthru
          _
      $region16: #{tpu_custom_call.1} parent=5 // pred_fallthru
        _
      %p103 = scmp.le.s32.totalorder 1, %s13
      %p104 = scmp.lt.s32.totalorder %s13, 3
      %p105 = pnand %p103, %p104
      %p106 = pneg %p105
      // Predicated region
      $region21: #{tpu_custom_call.1} parent=5 // pred_check
        _
      $region22: #{tpu_custom_call.1} parent=5 // pred_check_branch
        %108 = sbr.rel (%p105) target = $region24
      $region23: #{tpu_custom_call.1} parent=5 // pred_region
        %s109 = ssub.s32 %s13, 1
        %s110 = sand.u32 %s26, 1
        %s111 = scalar_lea.sflag [#allocation3], %s110
        %s112 = sand.u32 %s26, 1
        %s113 = smul.addr %s112, 16
        %s114 = scalar_lea.vmem [#allocation2], %s113
        // Predicated region
        $region25: #{tpu_custom_call.1} parent=23 // pred_check
          %p115 = pneg %p39
        $region26: #{tpu_custom_call.1} parent=23 // pred_check_branch
          %117 = sbr.rel (%p115) target = $region28
        $region27: #{tpu_custom_call.1} parent=23 // pred_region
          %118 = dma.done %s111, 256
        $region28: #{tpu_custom_call.1} parent=23 // pred_fallthru
          _
        %s119 = sand.u32 %s26, 1
        %s120 = scalar_lea.sflag [#allocation3], %s119
        %s121 = sand.u32 %s26, 1
        %s122 = smul.addr %s121, 16
        %s123 = scalar_lea.vmem [#allocation2], %s122
        %p124 = pneg %p39
        %p125 = pneg %p36
        %p126 = pneg %p65
        %p127 = pneg %p62
        %s128 = sand.u32 %s52, 1
        %s129 = scalar_lea.sflag [#allocation4], %s128
        %s130 = sand.u32 %s52, 1
        %s131 = smul.addr %s130, 8
        %s132 = scalar_lea.vmem [#allocation5], %s131
        %v133 = vld [vmem:[%s114] sm:$0xff]
        %v134 = vld [vmem:[%s114 + $0x8] sm:$0xff]
        %v135 = vxor.u32 %v134, 2147483648
        %v136 = vmul.f32 %v135, 1.442695
        %v137 = vpow.pop %v136
        %v138 = vadd.f32 %v137, 1.0
        %v139 = vrcp.pop %v138
        %v140 = vmul.f32 1.0, %v139
        %v141 = vmul.f32 %v134, %v140
        %v142 = vmul.f32 %v133, %v141
        %143 = vst [vmem:[%s132] sm:$0xff] %v142
        %s144 = sand.u32 %s52, 1
        %s145 = scalar_lea.sflag [#allocation4], %s144
        %s146 = sand.u32 %s52, 1
        %s147 = smul.addr %s146, 8
        %s148 = scalar_lea.vmem [#allocation5], %s147
        // Predicated region
        $region29: #{tpu_custom_call.1} parent=23 // pred_check
          %p149 = pneg %p62
        $region30: #{tpu_custom_call.1} parent=23 // pred_check_branch
          %151 = sbr.rel (%p149) target = $region32
        $region31: #{tpu_custom_call.1} parent=23 // pred_region
          %s153 = ssub.s32 128, 128
          %154 = vsyncadd %s145, %s153
          %s155 = smul.addr %s18, 128
          %s156 = scalar_lea.hbm %s1, %s155
          %s158 = sshll.u32 %s148, 4
          %s159 = int_to_ptr.vmem [resolvable:$true] %s158
          %161 = dma.vmem_to_hbm [thread:$0]  %s159, 128, %s156, %s145
        $region32: #{tpu_custom_call.1} parent=23 // pred_fallthru
          _
      $region24: #{tpu_custom_call.1} parent=5 // pred_fallthru
        _
      %p162 = scmp.le.s32.totalorder 2, %s13
      // Predicated region
      $region33: #{tpu_custom_call.1} parent=5 // pred_check
        %p163 = pneg %p162
      $region34: #{tpu_custom_call.1} parent=5 // pred_check_branch
        %165 = sbr.rel (%p163) target = $region36
      $region35: #{tpu_custom_call.1} parent=5 // pred_region
        %s166 = ssub.s32 %s13, 2
        // Predicated region
        $region37: #{tpu_custom_call.1} parent=35 // pred_check
          %p167 = pneg %p68
        $region38: #{tpu_custom_call.1} parent=35 // pred_check_branch
          %169 = sbr.rel (%p167) target = $region40
        $region39: #{tpu_custom_call.1} parent=35 // pred_region
          %s170 = sand.u32 %s53, 1
          %s171 = scalar_lea.sflag [#allocation4], %s170
          %s172 = sand.u32 %s53, 1
          %s173 = smul.addr %s172, 8
          %s174 = scalar_lea.vmem [#allocation5], %s173
          %175 = dma.done %s171, 128
        $region40: #{tpu_custom_call.1} parent=35 // pred_fallthru
          _
      $region36: #{tpu_custom_call.1} parent=5 // pred_fallthru
        _
    $region6: #{tpu_custom_call.1} parent=1 // loop_footer
      %s17 = sadd.s32 1, %s13
    $region7: #{tpu_custom_call.1} parent=1 // loop_footer_branch
      %12 = sbr.rel target = $region3
    $region8: #{tpu_custom_call.1} parent=1 // loop_exit
      _
    %176 = vsyncpa [#allocation3], 1
    %s177 = scalar_lea.sflag [#allocation3], 1
    %178 = vsyncpa %s177, 1
    %179 = vsyncpa [#allocation4], 1
    %s180 = scalar_lea.sflag [#allocation4], 1
    %181 = vsyncpa %s180, 1

</llo_original>
